<compile_context>
chip_gen: v5e
topology: v5e:2x2
jax: 0.10.0
libtpu: 0.0.40
codegen_flags: <defaults>
</compile_context>

<pallas_src>
import jax
import jax.numpy as jnp
import numpy as np
from jax.experimental import pallas as pl
from jax.experimental.pallas import tpu as pltpu

LANE = 128
SUBLANE = 8


def _round_up(x, m):
    return ((x + m - 1) // m) * m


def _pad_lanes(x, target):
    pad = target - x.shape[-1]
    if pad == 0:
        return x
    return jnp.pad(x, [(0, 0)] * (x.ndim - 1) + [(0, pad)])


def news_encoder_kernel(x_ref, u_ref, w_ref, b_ref, a_ref, ab_ref, o_ref):
    """One batch tile per grid step; fully fused, lane-dense.

    x_ref : [TB, L, KDp]  im2col'd, zero-padded word embeddings
    u_ref : [TB, Q]       user embeddings
    w_ref : [KDp, Fp]     conv weights in im2col layout (zero-padded)
    b_ref : [1, Fp]       conv bias
    a_ref : [Q, Fp]       attention query-projection weight (transposed)
    ab_ref: [1, Fp]       attention query-projection bias
    o_ref : [TB, Fp]      output news representation
    """
    TB, L, KDp = x_ref.shape
    Fp = w_ref.shape[1]

    # --- Conv2d: ONE fused MXU matmul for every batch row and every tap ---
    # [TB, L, KDp] -> [TB*L, KDp] merges leading (sublane-side) dims only, so
    # no relayout is required.
    x2 = x_ref[...].reshape(TB * L, KDp)
    conv = jnp.dot(x2, w_ref[...], preferred_element_type=jnp.float32) + b_ref[...]
    c = jnp.maximum(conv, 0.0).reshape(TB, L, Fp)        # dropout=identity; relu

    # --- Personalized query projection, whole tile at once (1 matmul + tanh) ---
    q = jnp.tanh(
        jnp.dot(u_ref[...], a_ref[...], preferred_element_type=jnp.float32)
        + ab_ref[...])                                   # [TB, Fp]

    # --- Attention scores + numerically stable softmax over the sequence ---
    s = jnp.sum(c * q[:, None, :], axis=-1)              # [TB, L]  (XLU reduce)
    s = s - jnp.max(s, axis=-1, keepdims=True)
    e = jnp.exp(s)
    inv = pl.reciprocal(jnp.sum(e, axis=-1, keepdims=True), approx=False)
    wts = e * inv                                        # softmax weights

    # --- Weighted pooling over the sequence, final tanh (dropout identity) ---
    # TODO(synk): for large L route this through an MXU einsum instead of the
    # VPU multiply + cross-sublane reduce.
    out = jnp.sum(wts[:, :, None] * c, axis=1)           # [TB, Fp]
    o_ref[...] = jnp.tanh(out)


def news_encoder_forward(word_embedding, user_embedding, params, window_sizes,
                         *, batch_tile=None):
    """Wrapper: im2col / weight repacking / lane padding in JAX, hot path in Pallas."""
    B, L, D = word_embedding.shape
    K = window_sizes
    pad = (K - 1) // 2      # matches PyTorch Conv2d output length only for odd K
    conv_w = params["conv_w"]          # [F, 1, K, D]  (PyTorch layout)
    conv_b = params["conv_b"]          # [F]
    attn_w = params["attn_w"]          # [F, Q]        (PyTorch Linear layout)
    attn_b = params["attn_b"]          # [F]
    F_ = conv_w.shape[0]
    Q = attn_w.shape[1]

    KD = K * D
    KDp = _round_up(KD, LANE)          # lane-pad contraction dim
    Fp = _round_up(F_, LANE)           # lane-pad filter dim -> unmasked vst

    # Batch tile: multiple of 8 sublanes; pad the batch up so it always divides
    # (padded rows are garbage and sliced off at the end).
    if batch_tile is None:
        batch_tile = min(_round_up(B, SUBLANE), 128)
    TB = _round_up(batch_tile, SUBLANE)
    Bp = _round_up(B, TB)

    x = word_embedding.astype(jnp.float32)
    u = user_embedding.astype(jnp.float32)
    if Bp != B:
        x = jnp.pad(x, ((0, Bp - B), (0, 0), (0, 0)))
        u = jnp.pad(u, ((0, Bp - B), (0, 0)))

    # im2col in plain JAX: x_col[b, l, k*D + d] = x_pad[b, l + k, d]
    x_seq = jnp.pad(x, ((0, 0), (pad, pad), (0, 0)))
    x_col = jnp.concatenate([x_seq[:, k:k + L, :] for k in range(K)], axis=-1)
    x_col = _pad_lanes(x_col, KDp)                               # [Bp, L, KDp]

    # conv weight -> im2col layout [K*D, F], zero-padded to [KDp, Fp]
    w2 = jnp.transpose(conv_w[:, 0].astype(jnp.float32), (1, 2, 0)).reshape(KD, F_)
    w2 = jnp.pad(w2, ((0, KDp - KD), (0, Fp - F_)))
    b2 = _pad_lanes(conv_b.astype(jnp.float32).reshape(1, F_), Fp)
    a2 = _pad_lanes(attn_w.T.astype(jnp.float32), Fp)            # [Q, Fp]
    ab2 = _pad_lanes(attn_b.astype(jnp.float32).reshape(1, F_), Fp)

    grid = (Bp // TB,)

    cost = pl.CostEstimate(
        flops=2 * Bp * L * KDp * Fp + 2 * Bp * Q * Fp + 2 * Bp * L * Fp,
        transcendentals=Bp * (2 * Fp + L),
        bytes_accessed=4 * (x_col.size + u.size + w2.size + b2.size
                            + a2.size + ab2.size + Bp * Fp),
    )

    # TODO(synk): for production-scale shapes, cast activations/weights to
    # bfloat16 here (keeping f32 accumulation) for v6e/v7x MXU peak throughput.
    out_p = pl.pallas_call(
        news_encoder_kernel,
        out_shape=jax.ShapeDtypeStruct((Bp, Fp), jnp.float32),
        grid_spec=pltpu.PrefetchScalarGridSpec(
            num_scalar_prefetch=0,
            grid=grid,
            in_specs=[
                pl.BlockSpec((TB, L, KDp), lambda i: (i, 0, 0)),   # x (tiled on B)
                pl.BlockSpec((TB, Q), lambda i: (i, 0)),           # user embedding
                pl.BlockSpec((KDp, Fp), lambda i: (0, 0)),         # conv weight
                pl.BlockSpec((1, Fp), lambda i: (0, 0)),           # conv bias
                pl.BlockSpec((Q, Fp), lambda i: (0, 0)),           # attn weight
                pl.BlockSpec((1, Fp), lambda i: (0, 0)),           # attn bias
            ],
            out_specs=pl.BlockSpec((TB, Fp), lambda i: (i, 0)),
        ),
        compiler_params=pltpu.CompilerParams(
            dimension_semantics=("parallel",)),
        cost_estimate=cost,
    )(x_col, u, w2, b2, a2, ab2)
    return out_p[:B, :F_]


def news_encoder_reference(word_embedding, user_embedding, params, window_sizes):
    """Pure-JAX reference mirroring the PyTorch forward (eval mode)."""
    B, L, D = word_embedding.shape
    K = window_sizes
    pad = (K - 1) // 2
    conv_w, conv_b = params["conv_w"], params["conv_b"]
    attn_w, attn_b = params["attn_w"], params["attn_b"]

    x_pad = jnp.pad(word_embedding, ((0, 0), (pad, pad), (0, 0)))
    conv = jnp.stack(
        [jnp.einsum("bld,fd->blf", x_pad[:, k:k + L, :], conv_w[:, 0, k, :])
         for k in range(K)], axis=0).sum(0) + conv_b[None, None, :]
    c = jax.nn.relu(conv)                                  # [B, L, F]
    q = jnp.tanh(user_embedding @ attn_w.T + attn_b)       # [B, F]
    scores = jnp.einsum("blf,bf->bl", c, q)                # [B, L]
    wts = jax.nn.softmax(scores, axis=1)
    out = jnp.einsum("bl,blf->bf", wts, c)
    return jnp.tanh(out)


if __name__ == "__main__":
    # small shapes consistent with the module (B=16 with batch_tile=8 so the
    # batch grid has 2 steps and the "parallel" axis / pipelining is exercised)
    B, L = 16, 8              # batch, sequence length (title length)
    word_dim = 32
    num_filters = 16
    window_sizes = 3
    query_vector_dim = 8

    key = jax.random.PRNGKey(0)
    k1, k2, k3, k4, k5, k6 = jax.random.split(key, 6)

    params = {
        "conv_w": 0.1 * jax.random.normal(
            k1, (num_filters, 1, window_sizes, word_dim), jnp.float32),
        "conv_b": 0.1 * jax.random.normal(k2, (num_filters,), jnp.float32),
        "attn_w": 0.1 * jax.random.normal(
            k3, (num_filters, query_vector_dim), jnp.float32),
        "attn_b": 0.1 * jax.random.normal(k4, (num_filters,), jnp.float32),
    }
    word_embedding = jax.random.normal(k5, (B, L, word_dim), jnp.float32)
    user_embedding = jax.random.normal(k6, (B, query_vector_dim), jnp.float32)

    # TODO(synk): dropout (p=0.3) is a no-op in inference mode; training-mode
    # stochastic dropout is not implemented.
    out = news_encoder_forward(word_embedding, user_embedding, params,
                               window_sizes, batch_tile=8)
    out = jax.block_until_ready(out)

    ref = news_encoder_reference(word_embedding, user_embedding, params, window_sizes)
    np.testing.assert_allclose(np.asarray(out), np.asarray(ref), rtol=1e-5, atol=1e-5)

    print("KERNEL_OK")
</pallas_src>

<mosaic_0001>
module attributes {stable_mosaic.version = 11 : i64} {
  func.func @news_encoder_kernel(%arg0: i32, %arg1: memref<8x8x128xf32, #tpu.memory_space<vmem>>, %arg2: memref<8x8xf32, #tpu.memory_space<vmem>>, %arg3: memref<128x128xf32, #tpu.memory_space<vmem>>, %arg4: memref<1x128xf32, #tpu.memory_space<vmem>>, %arg5: memref<8x128xf32, #tpu.memory_space<vmem>>, %arg6: memref<1x128xf32, #tpu.memory_space<vmem>>, %arg7: memref<8x128xf32, #tpu.memory_space<vmem>>) attributes {dimension_semantics = [#tpu.dimension_semantics<parallel>], iteration_bounds = array<i64: 2>, scalar_prefetch = 0 : i64, scratch_operands = 0 : i64, tpu.core_type = #tpu.core_type<tc>, window_params = [{transform_indices = @transform_0, window_bounds = array<i64: 8, 8, 128>}, {transform_indices = @transform_1, window_bounds = array<i64: 8, 8>}, {pipeline_mode = #tpu.pipeline_mode<synchronous>, transform_indices = @transform_2, window_bounds = array<i64: 128, 128>}, {pipeline_mode = #tpu.pipeline_mode<synchronous>, transform_indices = @transform_3, window_bounds = array<i64: 1, 128>}, {pipeline_mode = #tpu.pipeline_mode<synchronous>, transform_indices = @transform_4, window_bounds = array<i64: 8, 128>}, {pipeline_mode = #tpu.pipeline_mode<synchronous>, transform_indices = @transform_5, window_bounds = array<i64: 1, 128>}, {transform_indices = @transform_6, window_bounds = array<i64: 8, 128>}]} {
    %c0 = arith.constant 0 : index
    %c0_0 = arith.constant 0 : index
    %c0_1 = arith.constant 0 : index
    %0 = vector.load %arg1[%c0, %c0_0, %c0_1] : memref<8x8x128xf32, #tpu.memory_space<vmem>>, vector<8x8x128xf32>
    %1 = vector.shape_cast %0 : vector<8x8x128xf32> to vector<64x128xf32>
    %c0_2 = arith.constant 0 : index
    %c0_3 = arith.constant 0 : index
    %2 = vector.load %arg3[%c0_2, %c0_3] : memref<128x128xf32, #tpu.memory_space<vmem>>, vector<128x128xf32>
    %cst = arith.constant dense<0.000000e+00> : vector<64x128xf32>
    %3 = tpu.matmul %1, %2, %cst {dimension_numbers = #tpu.dot_dimension_numbers<[1], [0], [0], [1], [0, 0, 1, 1], [], []>} : vector<64x128xf32>, vector<128x128xf32>, vector<64x128xf32> -> vector<64x128xf32>
    %c0_4 = arith.constant 0 : index
    %c0_5 = arith.constant 0 : index
    %4 = vector.load %arg4[%c0_4, %c0_5] : memref<1x128xf32, #tpu.memory_space<vmem>>, vector<1x128xf32>
    %5 = vector.broadcast %4 : vector<1x128xf32> to vector<64x128xf32>
    %6 = arith.addf %3, %5 : vector<64x128xf32>
    %cst_6 = arith.constant 0.000000e+00 : f32
    %7 = vector.broadcast %cst_6 : f32 to vector<64x128xf32>
    %8 = arith.maximumf %6, %7 : vector<64x128xf32>
    %9 = vector.shape_cast %8 : vector<64x128xf32> to vector<8x8x128xf32>
    %c0_7 = arith.constant 0 : index
    %c0_8 = arith.constant 0 : index
    %10 = vector.load %arg2[%c0_7, %c0_8] : memref<8x8xf32, #tpu.memory_space<vmem>>, vector<8x8xf32>
    %c0_9 = arith.constant 0 : index
    %c0_10 = arith.constant 0 : index
    %11 = vector.load %arg5[%c0_9, %c0_10] : memref<8x128xf32, #tpu.memory_space<vmem>>, vector<8x128xf32>
    %cst_11 = arith.constant dense<0.000000e+00> : vector<8x128xf32>
    %12 = tpu.matmul %10, %11, %cst_11 {dimension_numbers = #tpu.dot_dimension_numbers<[1], [0], [0], [1], [0, 0, 1, 1], [], []>} : vector<8x8xf32>, vector<8x128xf32>, vector<8x128xf32> -> vector<8x128xf32>
    %c0_12 = arith.constant 0 : index
    %c0_13 = arith.constant 0 : index
    %13 = vector.load %arg6[%c0_12, %c0_13] : memref<1x128xf32, #tpu.memory_space<vmem>>, vector<1x128xf32>
    %14 = vector.broadcast %13 : vector<1x128xf32> to vector<8x128xf32>
    %15 = arith.addf %12, %14 : vector<8x128xf32>
    %16 = math.tanh %15 : vector<8x128xf32>
    %17 = vector.shape_cast %16 : vector<8x128xf32> to vector<8x1x128xf32>
    %18 = vector.broadcast %17 : vector<8x1x128xf32> to vector<8x8x128xf32>
    %19 = arith.mulf %9, %18 : vector<8x8x128xf32>
    %cst_14 = arith.constant dense<0.000000e+00> : vector<8x8xf32>
    %20 = vector.multi_reduction <add>, %19, %cst_14 [2] : vector<8x8x128xf32> to vector<8x8xf32>
    %cst_15 = arith.constant dense<0xFF800000> : vector<8xf32>
    %21 = vector.multi_reduction <maximumf>, %20, %cst_15 [1] : vector<8x8xf32> to vector<8xf32>
    %22 = vector.shape_cast %21 : vector<8xf32> to vector<8x1xf32>
    %23 = vector.broadcast %22 : vector<8x1xf32> to vector<8x8xf32>
    %24 = arith.subf %20, %23 : vector<8x8xf32>
    %25 = math.exp %24 : vector<8x8xf32>
    %cst_16 = arith.constant dense<0.000000e+00> : vector<8xf32>
    %26 = vector.multi_reduction <add>, %25, %cst_16 [1] : vector<8x8xf32> to vector<8xf32>
    %27 = vector.shape_cast %26 : vector<8xf32> to vector<8x1xf32>
    %28 = tpu.reciprocal %27 : vector<8x1xf32> -> vector<8x1xf32>
    %29 = vector.broadcast %28 : vector<8x1xf32> to vector<8x8xf32>
    %30 = arith.mulf %25, %29 : vector<8x8xf32>
    %31 = vector.shape_cast %30 : vector<8x8xf32> to vector<8x8x1xf32>
    %32 = vector.broadcast %31 : vector<8x8x1xf32> to vector<8x8x128xf32>
    %33 = arith.mulf %32, %9 : vector<8x8x128xf32>
    %cst_17 = arith.constant dense<0.000000e+00> : vector<8x128xf32>
    %34 = vector.multi_reduction <add>, %33, %cst_17 [1] : vector<8x8x128xf32> to vector<8x128xf32>
    %35 = math.tanh %34 : vector<8x128xf32>
    %c0_18 = arith.constant 0 : index
    %c0_19 = arith.constant 0 : index
    %36 = vector.load %arg7[%c0_18, %c0_19] : memref<8x128xf32, #tpu.memory_space<vmem>>, vector<8x128xf32>
    tpu.vector_store %arg7[%c0_18, %c0_19], %35 {strides = array<i32>} : memref<8x128xf32, #tpu.memory_space<vmem>>, vector<8x128xf32>,
    return
  }
  func.func @transform_0(%arg0: i32) -> (i32, i32, i32) {
    %c0_i32 = arith.constant 0 : i32
    %c0_i32_0 = arith.constant 0 : i32
    %c0_i32_1 = arith.constant 0 : i32
    return %arg0, %c0_i32, %c0_i32_0 : i32, i32, i32
  }
  func.func @transform_1(%arg0: i32) -> (i32, i32) {
    %c0_i32 = arith.constant 0 : i32
    %c0_i32_0 = arith.constant 0 : i32
    return %arg0, %c0_i32 : i32, i32
  }
  func.func @transform_2(%arg0: i32) -> (i32, i32) {
    %c0_i32 = arith.constant 0 : i32
    %c0_i32_0 = arith.constant 0 : i32
    %c0_i32_1 = arith.constant 0 : i32
    return %c0_i32, %c0_i32_0 : i32, i32
  }
  func.func @transform_3(%arg0: i32) -> (i32, i32) {
    %c0_i32 = arith.constant 0 : i32
    %c0_i32_0 = arith.constant 0 : i32
    %c0_i32_1 = arith.constant 0 : i32
    return %c0_i32, %c0_i32_0 : i32, i32
  }
  func.func @transform_4(%arg0: i32) -> (i32, i32) {
    %c0_i32 = arith.constant 0 : i32
    %c0_i32_0 = arith.constant 0 : i32
    %c0_i32_1 = arith.constant 0 : i32
    return %c0_i32, %c0_i32_0 : i32, i32
  }
  func.func @transform_5(%arg0: i32) -> (i32, i32) {
    %c0_i32 = arith.constant 0 : i32
    %c0_i32_0 = arith.constant 0 : i32
    %c0_i32_1 = arith.constant 0 : i32
    return %c0_i32, %c0_i32_0 : i32, i32
  }
  func.func @transform_6(%arg0: i32) -> (i32, i32) {
    %c0_i32 = arith.constant 0 : i32
    %c0_i32_0 = arith.constant 0 : i32
    return %arg0, %c0_i32 : i32, i32
  }
}

</mosaic_0001>

<llo_original>
// kernel: tpu_custom_call.1
$region0: #{tpu_custom_call.1}
  #allocation0 [shape = 'u32[]', space=smem, size = 0x4, offset = 0x4, fixed_abs, tag = 'smem constant byte address 0x4 - core index']
  #allocation1 [shape = 'u32[72,128]{1,0:T(1,128)}', space=vmem, size = 0x9000, scoped, tag = 'internal scratch']
  %s0 = inlined_call_operand.hbm [shape: f32[16,8,128], index: 0, kind: input, shape index: {}]
  %s1 = inlined_call_operand.vmem [shape: f32[16,8], index: 1, kind: input, shape index: {}]
  %s2 = inlined_call_operand.hbm [shape: f32[128,128], index: 2, kind: input, shape index: {}]
  %s3 = inlined_call_operand.vmem [shape: f32[1,128], index: 3, kind: input, shape index: {}]
  %s4 = inlined_call_operand.vmem [shape: f32[8,128], index: 4, kind: input, shape index: {}]
  %s5 = inlined_call_operand.vmem [shape: f32[1,128], index: 5, kind: input, shape index: {}]
  %s6 = inlined_call_operand.hbm [shape: f32[16,128], index: 6, kind: output, shape index: {}]
  %s7 = sld [smem:[#allocation0]]
  $region65: #{tpu_custom_call.1} parent=0
    _
  %s9 = ssub.s32 1, %s7
  %s10 = scalar_select 0, %s9, %s7
  $region1: #{tpu_custom_call.1} parent=0
    #allocation2 [shape = 'u8[65536]{0}', space=vmem, size = 0x10000, scoped, tag = 'input window, operand 0']
    #allocation3 [shape = 's32[2]{0}', space=sflag, size = 0x8, scoped, tag = 'scoped memory for tpu_custom_call.1']
    #allocation4 [shape = 's32[2]{0}', space=sflag, size = 0x8, scoped, tag = 'scoped memory for tpu_custom_call.1']
    #allocation5 [shape = 'u8[65536]{0}', space=vmem, size = 0x10000, scoped, tag = 'input window, operand 2, single buffered']
    #allocation6 [shape = 's32[1]{0}', space=sflag, size = 0x4, scoped, tag = 'scoped memory for tpu_custom_call.1']
    #allocation7 [shape = 'u8[8192]{0}', space=vmem, size = 0x2000, scoped, tag = 'output window, operand 0']
    %11 = vsyncpa [#allocation3], 0
    %s12 = scalar_lea.sflag [#allocation3], 1
    %13 = vsyncpa %s12, 0
    %14 = vsyncpa [#allocation6], 0
    %15 = vsyncpa [#allocation4], 0
    %s16 = scalar_lea.sflag [#allocation4], 1
    %17 = vsyncpa %s16, 0
    loop: start=0, step=1, limit=4
    $region2: #{tpu_custom_call.1} parent=1 // loop_pre_header
      _
    $region3: #{tpu_custom_call.1} parent=1 // loop_header
      %s19 = sphi 0, %s23
      %p20 = scmp.ge.s32.totalorder %s19, 4
      %s29 = sphi 0, %s31
      %s32 = sphi 0, %s29
      %s33 = sphi 0, %s32
      %s49 = sphi 0, %s33
      %s55 = sphi 0, %s57
      %s58 = sphi 0, %s55
      %s59 = sphi 0, %s58
      %s75 = sphi 0, %s59
      %s79 = sphi 0, %s79
      %s81 = sphi 0, %s79
      %s82 = sphi 0, %s81
      %s96 = sphi 0, %s82
      %s100 = sphi 0, %s100
      %s102 = sphi 0, %s100
      %s103 = sphi 0, %s102
      %s117 = sphi 0, %s103
      %s121 = sphi 0, %s121
      %s123 = sphi 0, %s121
      %s124 = sphi 0, %s123
      %s138 = sphi 0, %s124
      %s142 = sphi 0, %s142
      %s144 = sphi 0, %s142
      %s145 = sphi 0, %s144
      %s159 = sphi 0, %s145
      %s165 = sphi 0, %s167
      %s168 = sphi 0, %s165
      %s169 = sphi 0, %s168
      %s185 = sphi 0, %s169
    $region4: #{tpu_custom_call.1} parent=1 // loop_header_branch
      %22 = sbr.rel (%p20) target = $region8
    $region5: #{tpu_custom_call.1} parent=1 // loop_body
      %s24 = ssub.s32 %s19, 1
      %s25 = ssub.s32 %s19, 2
      %s26 = sadd.s32 %s19, 1
      %s27 = ssub.s32 %s19, %s26
      %p28 = scmp.eq.s32.totalorder %s27, 0
      %s30 = sadd.s32 %s29, 1
      %s31 = scalar_select %p28, %s29, %s30
      %p34 = pneg %p28
      %p35 = scmp.eq.s32.totalorder %s19, 1
      %p36 = por %p34, %p35
      %p37 = scmp.ne.s32.totalorder %s29, %s32
      %p38 = scmp.eq.s32.totalorder %s19, 0
      %p39 = por %p37, %p38
      %p40 = scmp.ne.s32.totalorder %s29, %s32
      %p41 = scmp.eq.s32.totalorder %s24, 1
      %p42 = por %p40, %p41
      %p43 = scmp.ne.s32.totalorder %s32, %s33
      %p44 = scmp.eq.s32.totalorder %s24, 0
      %p45 = por %p43, %p44
      %p46 = scmp.ne.s32.totalorder %s32, %s33
      %p47 = scmp.eq.s32.totalorder %s25, 1
      %p48 = por %p46, %p47
      %p50 = scmp.ne.s32.totalorder %s33, %s49
      %p51 = scmp.eq.s32.totalorder %s25, 0
      %p52 = por %p50, %p51
      %s53 = ssub.s32 %s19, %s26
      %p54 = scmp.eq.s32.totalorder %s53, 0
      %s56 = sadd.s32 %s55, 1
      %s57 = scalar_select %p54, %s55, %s56
      %p60 = pneg %p54
      %p61 = scmp.eq.s32.totalorder %s19, 1
      %p62 = por %p60, %p61
      %p63 = scmp.ne.s32.totalorder %s55, %s58
      %p64 = scmp.eq.s32.totalorder %s19, 0
      %p65 = por %p63, %p64
      %p66 = scmp.ne.s32.totalorder %s55, %s58
      %p67 = scmp.eq.s32.totalorder %s24, 1
      %p68 = por %p66, %p67
      %p69 = scmp.ne.s32.totalorder %s58, %s59
      %p70 = scmp.eq.s32.totalorder %s24, 0
      %p71 = por %p69, %p70
      %p72 = scmp.ne.s32.totalorder %s58, %s59
      %p73 = scmp.eq.s32.totalorder %s25, 1
      %p74 = por %p72, %p73
      %p76 = scmp.ne.s32.totalorder %s59, %s75
      %p77 = scmp.eq.s32.totalorder %s25, 0
      %p78 = por %p76, %p77
      %s80 = sadd.s32 %s79, 1
      %p83 = scmp.eq.s32.totalorder %s19, 1
      %p84 = scmp.ne.s32.totalorder %s79, %s81
      %p85 = scmp.eq.s32.totalorder %s19, 0
      %p86 = por %p84, %p85
      %p87 = scmp.ne.s32.totalorder %s79, %s81
      %p88 = scmp.eq.s32.totalorder %s24, 1
      %p89 = por %p87, %p88
      %p90 = scmp.ne.s32.totalorder %s81, %s82
      %p91 = scmp.eq.s32.totalorder %s24, 0
      %p92 = por %p90, %p91
      %p93 = scmp.ne.s32.totalorder %s81, %s82
      %p94 = scmp.eq.s32.totalorder %s25, 1
      %p95 = por %p93, %p94
      %p97 = scmp.ne.s32.totalorder %s82, %s96
      %p98 = scmp.eq.s32.totalorder %s25, 0
      %p99 = por %p97, %p98
      %s101 = sadd.s32 %s100, 1
      %p104 = scmp.eq.s32.totalorder %s19, 1
      %p105 = scmp.ne.s32.totalorder %s100, %s102
      %p106 = scmp.eq.s32.totalorder %s19, 0
      %p107 = por %p105, %p106
      %p108 = scmp.ne.s32.totalorder %s100, %s102
      %p109 = scmp.eq.s32.totalorder %s24, 1
      %p110 = por %p108, %p109
      %p111 = scmp.ne.s32.totalorder %s102, %s103
      %p112 = scmp.eq.s32.totalorder %s24, 0
      %p113 = por %p111, %p112
      %p114 = scmp.ne.s32.totalorder %s102, %s103
      %p115 = scmp.eq.s32.totalorder %s25, 1
      %p116 = por %p114, %p115
      %p118 = scmp.ne.s32.totalorder %s103, %s117
      %p119 = scmp.eq.s32.totalorder %s25, 0
      %p120 = por %p118, %p119
      %s122 = sadd.s32 %s121, 1
      %p125 = scmp.eq.s32.totalorder %s19, 1
      %p126 = scmp.ne.s32.totalorder %s121, %s123
      %p127 = scmp.eq.s32.totalorder %s19, 0
      %p128 = por %p126, %p127
      %p129 = scmp.ne.s32.totalorder %s121, %s123
      %p130 = scmp.eq.s32.totalorder %s24, 1
      %p131 = por %p129, %p130
      %p132 = scmp.ne.s32.totalorder %s123, %s124
      %p133 = scmp.eq.s32.totalorder %s24, 0
      %p134 = por %p132, %p133
      %p135 = scmp.ne.s32.totalorder %s123, %s124
      %p136 = scmp.eq.s32.totalorder %s25, 1
      %p137 = por %p135, %p136
      %p139 = scmp.ne.s32.totalorder %s124, %s138
      %p140 = scmp.eq.s32.totalorder %s25, 0
      %p141 = por %p139, %p140
      %s143 = sadd.s32 %s142, 1
      %p146 = scmp.eq.s32.totalorder %s19, 1
      %p147 = scmp.ne.s32.totalorder %s142, %s144
      %p148 = scmp.eq.s32.totalorder %s19, 0
      %p149 = por %p147, %p148
      %p150 = scmp.ne.s32.totalorder %s142, %s144
      %p151 = scmp.eq.s32.totalorder %s24, 1
      %p152 = por %p150, %p151
      %p153 = scmp.ne.s32.totalorder %s144, %s145
      %p154 = scmp.eq.s32.totalorder %s24, 0
      %p155 = por %p153, %p154
      %p156 = scmp.ne.s32.totalorder %s144, %s145
      %p157 = scmp.eq.s32.totalorder %s25, 1
      %p158 = por %p156, %p157
      %p160 = scmp.ne.s32.totalorder %s145, %s159
      %p161 = scmp.eq.s32.totalorder %s25, 0
      %p162 = por %p160, %p161
      %s163 = ssub.s32 %s19, %s26
      %p164 = scmp.eq.s32.totalorder %s163, 0
      %s166 = sadd.s32 %s165, 1
      %s167 = scalar_select %p164, %s165, %s166
      %p170 = pneg %p164
      %p171 = scmp.eq.s32.totalorder %s19, 1
      %p172 = por %p170, %p171
      %p173 = scmp.ne.s32.totalorder %s165, %s168
      %p174 = scmp.eq.s32.totalorder %s19, 0
      %p175 = por %p173, %p174
      %p176 = scmp.ne.s32.totalorder %s165, %s168
      %p177 = scmp.eq.s32.totalorder %s24, 1
      %p178 = por %p176, %p177
      %p179 = scmp.ne.s32.totalorder %s168, %s169
      %p180 = scmp.eq.s32.totalorder %s24, 0
      %p181 = por %p179, %p180
      %p182 = scmp.ne.s32.totalorder %s168, %s169
      %p183 = scmp.eq.s32.totalorder %s25, 1
      %p184 = por %p182, %p183
      %p186 = scmp.ne.s32.totalorder %s169, %s185
      %p187 = scmp.eq.s32.totalorder %s25, 0
      %p188 = por %p186, %p187
      %p189 = scmp.le.s32.totalorder 1, %s19
      %p190 = scmp.lt.s32.totalorder %s19, 3
      %p191 = pnand %p189, %p190
      %p192 = pneg %p191
      // Predicated region
      $region9: #{tpu_custom_call.1} parent=5 // pred_check
        _
      $region10: #{tpu_custom_call.1} parent=5 // pred_check_branch
        %194 = sbr.rel (%p191) target = $region12
      $region11: #{tpu_custom_call.1} parent=5 // pred_region
        %s195 = ssub.s32 %s19, 1
        // Predicated region
        $region13: #{tpu_custom_call.1} parent=11 // pred_check
          %p196 = pneg %p92
        $region14: #{tpu_custom_call.1} parent=11 // pred_check_branch
          %198 = sbr.rel (%p196) target = $region16
        $region15: #{tpu_custom_call.1} parent=11 // pred_region
          %200 = vsyncadd [#allocation6], 0
          %s201 = sshll.u32 %s2, 4
          %s202 = int_to_ptr.hbm [resolvable:$true] %s201
          %s203 = sshll.u32 [#allocation5], 4
          %s204 = int_to_ptr.vmem [resolvable:$true] %s203
          %209 = dma.hbm_to_vmem [thread:$0]  %s202, 2048, %s204, [#allocation6], 128, 128, 8
        $region16: #{tpu_custom_call.1} parent=11 // pred_fallthru
          _
        // Predicated region
        $region17: #{tpu_custom_call.1} parent=11 // pred_check
          %p210 = pneg %p113
        $region18: #{tpu_custom_call.1} parent=11 // pred_check_branch
          %212 = sbr.rel (%p210) target = $region20
        $region19: #{tpu_custom_call.1} parent=11 // pred_region
          _
        $region20: #{tpu_custom_call.1} parent=11 // pred_fallthru
          _
        // Predicated region
        $region21: #{tpu_custom_call.1} parent=11 // pred_check
          %p213 = pneg %p134
        $region22: #{tpu_custom_call.1} parent=11 // pred_check_branch
          %215 = sbr.rel (%p213) target = $region24
        $region23: #{tpu_custom_call.1} parent=11 // pred_region
          _
        $region24: #{tpu_custom_call.1} parent=11 // pred_fallthru
          _
        // Predicated region
        $region25: #{tpu_custom_call.1} parent=11 // pred_check
          %p216 = pneg %p155
        $region26: #{tpu_custom_call.1} parent=11 // pred_check_branch
          %218 = sbr.rel (%p216) target = $region28
        $region27: #{tpu_custom_call.1} parent=11 // pred_region
          _
        $region28: #{tpu_custom_call.1} parent=11 // pred_fallthru
          _
      $region12: #{tpu_custom_call.1} parent=5 // pred_fallthru
        _
      %p219 = scmp.lt.s32.totalorder %s19, 2
      // Predicated region
      $region29: #{tpu_custom_call.1} parent=5 // pred_check
        %p220 = pneg %p219
      $region30: #{tpu_custom_call.1} parent=5 // pred_check_branch
        %222 = sbr.rel (%p220) target = $region32
      $region31: #{tpu_custom_call.1} parent=5 // pred_region
        // Predicated region
        $region33: #{tpu_custom_call.1} parent=31 // pred_check
          %p223 = pneg %p39
        $region34: #{tpu_custom_call.1} parent=31 // pred_check_branch
          %225 = sbr.rel (%p223) target = $region36
        $region35: #{tpu_custom_call.1} parent=31 // pred_region
          %s226 = sand.u32 %s29, 1
          %s227 = scalar_lea.sflag [#allocation3], %s226
          %s228 = sand.u32 %s29, 1
          %s229 = smul.addr %s228, 64
          %s230 = scalar_lea.vmem [#allocation2], %s229
          %s231 = smul.u32 8, %s19
          %233 = vsyncadd %s227, 0
          %s234 = smul.addr %s231, 8
          %s235 = scalar_lea.hbm %s0, %s234
          %s236 = sshll.u32 %s235, 4
          %s237 = int_to_ptr.hbm [resolvable:$true] %s236
          %s238 = sshll.u32 %s230, 4
          %s239 = int_to_ptr.vmem [resolvable:$true] %s238
          %244 = dma.hbm_to_vmem [thread:$0]  %s237, 1024, %s239, %s227, 128, 128, 8
        $region36: #{tpu_custom_call.1} parent=31 // pred_fallthru
          _
        // Predicated region
        $region37: #{tpu_custom_call.1} parent=31 // pred_check
          %p245 = pneg %p65
        $region38: #{tpu_custom_call.1} parent=31 // pred_check_branch
          %247 = sbr.rel (%p245) target = $region40
        $region39: #{tpu_custom_call.1} parent=31 // pred_region
          %p248 = scmp.lt.s32.totalorder %s19, 1
          %s249 = scalar_select %p248, %s19, 1
          %s250 = smul.addr %s249, 8
          %s251 = scalar_lea.vmem %s1, %s250
        $region40: #{tpu_custom_call.1} parent=31 // pred_fallthru
          _
      $region32: #{tpu_custom_call.1} parent=5 // pred_fallthru
        _
      %p252 = scmp.le.s32.totalorder 1, %s19
      %p253 = scmp.lt.s32.totalorder %s19, 3
      %p254 = pnand %p252, %p253
      %p255 = pneg %p254
      // Predicated region
      $region41: #{tpu_custom_call.1} parent=5 // pred_check
        _
      $region42: #{tpu_custom_call.1} parent=5 // pred_check_branch
        %257 = sbr.rel (%p254) target = $region44
      $region43: #{tpu_custom_call.1} parent=5 // pred_region
        %s258 = ssub.s32 %s19, 1
        %s259 = sand.u32 %s32, 1
        %s260 = scalar_lea.sflag [#allocation3], %s259
        %s261 = sand.u32 %s32, 1
        %s262 = smul.addr %s261, 64
        %s263 = scalar_lea.vmem [#allocation2], %s262
        // Predicated region
        $region45: #{tpu_custom_call.1} parent=43 // pred_check
          %p264 = pneg %p45
        $region46: #{tpu_custom_call.1} parent=43 // pred_check_branch
          %266 = sbr.rel (%p264) target = $region48
        $region47: #{tpu_custom_call.1} parent=43 // pred_region
          %268 = dma.done %s260, 1024
        $region48: #{tpu_custom_call.1} parent=43 // pred_fallthru
          _
        // Predicated region
        $region49: #{tpu_custom_call.1} parent=43 // pred_check
          %p269 = pneg %p92
        $region50: #{tpu_custom_call.1} parent=43 // pred_check_branch
          %271 = sbr.rel (%p269) target = $region52
        $region51: #{tpu_custom_call.1} parent=43 // pred_region
          %273 = dma.done [#allocation6], 2048
        $region52: #{tpu_custom_call.1} parent=43 // pred_fallthru
          _
        %s274 = sand.u32 %s32, 1
        %s275 = scalar_lea.sflag [#allocation3], %s274
        %s276 = sand.u32 %s32, 1
        %s277 = smul.addr %s276, 64
        %s278 = scalar_lea.vmem [#allocation2], %s277
        %p279 = pneg %p45
        %p280 = pneg %p42
        %p281 = scmp.lt.s32.totalorder %s24, 1
        %s282 = scalar_select %p281, %s24, 1
        %s283 = smul.addr %s282, 8
        %s284 = scalar_lea.vmem %s1, %s283
        %p285 = pneg %p71
        %p286 = pneg %p68
        %p287 = pneg %p92
        %p288 = pneg %p89
        %p289 = pneg %p113
        %p290 = pneg %p110
        %p291 = pneg %p134
        %p292 = pneg %p131
        %p293 = pneg %p155
        %p294 = pneg %p152
        %p295 = pneg %p181
        %p296 = pneg %p178
        %s297 = sand.u32 %s168, 1
        %s298 = scalar_lea.sflag [#allocation4], %s297
        %s299 = sand.u32 %s168, 1
        %s300 = smul.addr %s299, 8
        %s301 = scalar_lea.vmem [#allocation7], %s300
        %s302 = smul.u32 8, %s24
        %p303 = scmp.lt.s32.totalorder %s24, 1
        %s304 = scalar_select %p303, %s24, 1
        %s305 = smul.addr %s304, 8
        %s306 = scalar_lea.vmem %s1, %s305
        %v307 = vld [vmem:[%s263] sm:$0xff]
        %v308 = vld [vmem:[%s263 + $0x8] sm:$0xff]
        %v309 = vld [vmem:[%s263 + $0x10] sm:$0xff]
        %v310 = vld [vmem:[%s263 + $0x18] sm:$0xff]
        %v311 = vld [vmem:[%s263 + $0x20] sm:$0xff]
        %v312 = vld [vmem:[%s263 + $0x28] sm:$0xff]
        %v313 = vld [vmem:[%s263 + $0x30] sm:$0xff]
        %v314 = vld [vmem:[%s263 + $0x38] sm:$0xff]
        %v315 = vld [vmem:[#allocation5] sm:$0xff]
        %v316 = vld [vmem:[#allocation5 + $0x8] sm:$0xff]
        %v317 = vld [vmem:[#allocation5 + $0x10] sm:$0xff]
        %v318 = vld [vmem:[#allocation5 + $0x18] sm:$0xff]
        %v319 = vld [vmem:[#allocation5 + $0x20] sm:$0xff]
        %v320 = vld [vmem:[#allocation5 + $0x28] sm:$0xff]
        %v321 = vld [vmem:[#allocation5 + $0x30] sm:$0xff]
        %v322 = vld [vmem:[#allocation5 + $0x38] sm:$0xff]
        %v323 = vld [vmem:[#allocation5 + $0x40] sm:$0xff]
        %v324 = vld [vmem:[#allocation5 + $0x48] sm:$0xff]
        %v325 = vld [vmem:[#allocation5 + $0x50] sm:$0xff]
        %v326 = vld [vmem:[#allocation5 + $0x58] sm:$0xff]
        %v327 = vld [vmem:[#allocation5 + $0x60] sm:$0xff]
        %v328 = vld [vmem:[#allocation5 + $0x68] sm:$0xff]
        %v329 = vld [vmem:[#allocation5 + $0x70] sm:$0xff]
        %v330 = vld [vmem:[#allocation5 + $0x78] sm:$0xff]
        %v331 = vld [vmem:[%s3] sm:$0x1]
        %v333 = vperm.slane %v331, 0
        %335 = vmatpush.msra.mxu0 %v330
        %336 = vmatpush.msra.mxu0 %v329
        %337 = vmatpush.msra.mxu0 %v328
        %338 = vmatpush.msra.mxu0 %v327
        %339 = vmatpush.msra.mxu0 %v326
        %340 = vmatpush.msra.mxu0 %v325
        %341 = vmatpush.msra.mxu0 %v324
        %342 = vmatpush.msra.mxu0 %v323
        %343 = vmatpush.msra.mxu0 %v322
        %344 = vmatpush.msra.mxu0 %v321
        %345 = vmatpush.msra.mxu0 %v320
        %346 = vmatpush.msra.mxu0 %v319
        %347 = vmatpush.msra.mxu0 %v318
        %348 = vmatpush.msra.mxu0 %v317
        %349 = vmatpush.msra.mxu0 %v316
        %350 = vmatpush.msra.mxu0 %v315
        %351 = vmatmul.f32.gmra.mxu0 %v307
        %v352 = vpop.f32.mrf.mxu0
        %v353 = vadd.f32 %v333, %v352
        %354 = vmatmul.f32.gmra.mxu0 %v308
        %v355 = vpop.f32.mrf.mxu0
        %v356 = vadd.f32 %v333, %v355
        %357 = vmatmul.f32.gmra.mxu0 %v309
        %v358 = vpop.f32.mrf.mxu0
        %v359 = vadd.f32 %v333, %v358
        %360 = vmatmul.f32.gmra.mxu0 %v310
        %v361 = vpop.f32.mrf.mxu0
        %v362 = vadd.f32 %v333, %v361
        %363 = vmatmul.f32.gmra.mxu0 %v311
        %v364 = vpop.f32.mrf.mxu0
        %v365 = vadd.f32 %v333, %v364
        %366 = vmatmul.f32.gmra.mxu0 %v312
        %v367 = vpop.f32.mrf.mxu0
        %v368 = vadd.f32 %v333, %v367
        %369 = vmatmul.f32.gmra.mxu0 %v313
        %v370 = vpop.f32.mrf.mxu0
        %v371 = vadd.f32 %v333, %v370
        %372 = vmatmul.f32.gmra.mxu0 %v314
        %v373 = vpop.f32.mrf.mxu0
        %v374 = vadd.f32 %v333, %v373
        %375 = vdwg.mxu0
        %v376 = vmax.f32 %v353, 0.0
        %v377 = vmax.f32 %v356, 0.0
        %v378 = vmax.f32 %v359, 0.0
        %v379 = vmax.f32 %v362, 0.0
        %v380 = vmax.f32 %v365, 0.0
        %v381 = vmax.f32 %v368, 0.0
        %v382 = vmax.f32 %v371, 0.0
        %v383 = vmax.f32 %v374, 0.0
        %v384 = vld [vmem:[%s306] sm:$0xff]
        %v385 = vld [vmem:[%s4] sm:$0xff]
        %v386 = vld [vmem:[%s5] sm:$0x1]
        %v388 = vperm.slane %v386, 0
        %vm390 = vcmask 64512
        %v392 = vsel %vm390, %v384, 0
        %394 = vmatpush.msra.mxu0 0.0
        %395 = vmatpush.msra.mxu0 0.0
        %396 = vmatpush.msra.mxu0 0.0
        %397 = vmatpush.msra.mxu0 0.0
        %398 = vmatpush.msra.mxu0 0.0
        %399 = vmatpush.msra.mxu0 0.0
        %400 = vmatpush.msra.mxu0 0.0
        %401 = vmatpush.msra.mxu0 0.0
        %402 = vmatpush.msra.mxu0 0.0
        %403 = vmatpush.msra.mxu0 0.0
        %404 = vmatpush.msra.mxu0 0.0
        %405 = vmatpush.msra.mxu0 0.0
        %406 = vmatpush.msra.mxu0 0.0
        %407 = vmatpush.msra.mxu0 0.0
        %408 = vmatpush.msra.mxu0 0.0
        %409 = vmatpush.msra.mxu0 %v385
        %410 = vmatmul.f32.gmra.mxu0 %v392
        %v411 = vpop.f32.mrf.mxu0
        %v412 = vadd.f32 %v388, %v411
        %413 = vdwg.mxu0
        %v414 = vtanh.pop %v412
        %v416 = vrot.slane %v414, 1
        %v417 = vrot.slane %v414, 2
        %v418 = vrot.slane %v414, 3
        %v419 = vrot.slane %v414, 4
        %v420 = vrot.slane %v414, 5
        %v421 = vrot.slane %v414, 6
        %v422 = vrot.slane %v414, 7
        %v423 = vperm.slane %v414, 0
        %v424 = vperm.slane %v416, 0
        %v425 = vperm.slane %v417, 0
        %v426 = vperm.slane %v418, 0
        %v427 = vperm.slane %v419, 0
        %v428 = vperm.slane %v420, 0
        %v429 = vperm.slane %v421, 0
        %v430 = vperm.slane %v422, 0
        %v439 = vmul.f32 %v376, %v423
        %v440 = vmul.f32 %v377, %v424
        %v441 = vmul.f32 %v378, %v425
        %v442 = vmul.f32 %v379, %v426
        %v443 = vmul.f32 %v380, %v427
        %v444 = vmul.f32 %v381, %v428
        %v445 = vmul.f32 %v382, %v429
        %v446 = vmul.f32 %v383, %v430
        %447 = vadd.xlane.f32.xlu0 %v439
        %v448 = vpop.xlane.xlu0 %447
        %449 = vadd.xlane.f32.xlu0 %v440
        %v450 = vpop.xlane.xlu0 %449
        %451 = vadd.xlane.f32.xlu0 %v441
        %v452 = vpop.xlane.xlu0 %451
        %453 = vadd.xlane.f32.xlu0 %v442
        %v454 = vpop.xlane.xlu0 %453
        %455 = vadd.xlane.f32.xlu0 %v443
        %v456 = vpop.xlane.xlu0 %455
        %457 = vadd.xlane.f32.xlu0 %v444
        %v458 = vpop.xlane.xlu0 %457
        %459 = vadd.xlane.f32.xlu0 %v445
        %v460 = vpop.xlane.xlu0 %459
        %461 = vadd.xlane.f32.xlu0 %v446
        %v462 = vpop.xlane.xlu0 %461
        %v471 = vlaneseq
        %v472 = vand.u32 %v471, 127
        %v473 = vperm.slane %v448, %v472
        %v474 = vperm.slane %v450, %v472
        %v475 = vperm.slane %v452, %v472
        %v476 = vperm.slane %v454, %v472
        %v477 = vperm.slane %v456, %v472
        %v478 = vperm.slane %v458, %v472
        %v479 = vperm.slane %v460, %v472
        %v480 = vperm.slane %v462, %v472
        %vm481 = vcmask 1041409
        %v482 = vsel %vm481, %v474, %v473
        %vm483 = vcmask 1042434
        %v484 = vsel %vm483, %v475, %v482
        %vm485 = vcmask 1043459
        %v486 = vsel %vm485, %v476, %v484
        %vm487 = vcmask 1044484
        %v488 = vsel %vm487, %v477, %v486
        %vm489 = vcmask 1045509
        %v490 = vsel %vm489, %v478, %v488
        %vm491 = vcmask 1046534
        %v492 = vsel %vm491, %v479, %v490
        %vm493 = vcmask 1047559
        %v494 = vsel %vm493, %v480, %v492
        %v496 = vsel %vm390, %v494, -inf
        %497 = vmax.xlane.f32.xlu0 %v496
        %v498 = vpop.xlane.xlu0 %497
        %v500 = vperm.slane %v498, 0
        %v501 = vperm.slane %v498, 1
        %v502 = vperm.slane %v498, 2
        %v503 = vperm.slane %v498, 3
        %v504 = vperm.slane %v498, 4
        %v505 = vperm.slane %v498, 5
        %v506 = vperm.slane %v498, 6
        %v507 = vperm.slane %v498, 7
        %v516 = vsub.f32 %v448, %v500
        %v517 = vsub.f32 %v450, %v501
        %v518 = vsub.f32 %v452, %v502
        %v519 = vsub.f32 %v454, %v503
        %v520 = vsub.f32 %v456, %v504
        %v521 = vsub.f32 %v458, %v505
        %v522 = vsub.f32 %v460, %v506
        %v523 = vsub.f32 %v462, %v507
        %v524 = vmul.f32 %v516, 1.442695
        %v525 = vpow.pop %v524
        %v526 = vmul.f32 %v517, 1.442695
        %v527 = vpow.pop %v526
        %v528 = vmul.f32 %v518, 1.442695
        %v529 = vpow.pop %v528
        %v530 = vmul.f32 %v519, 1.442695
        %v531 = vpow.pop %v530
        %v532 = vmul.f32 %v520, 1.442695
        %v533 = vpow.pop %v532
        %v534 = vmul.f32 %v521, 1.442695
        %v535 = vpow.pop %v534
        %v536 = vmul.f32 %v522, 1.442695
        %v537 = vpow.pop %v536
        %v538 = vmul.f32 %v523, 1.442695
        %v539 = vpow.pop %v538
        %548 = vset.pattern.permute.xlu0 0
        %549 = vperm.xlu0 %548, %v525
        %v550 = vpop.permute.xlu0 %549
        %551 = vset.pattern.permute.xlu0 0
        %552 = vperm.xlu0 %551, %v527
        %v553 = vpop.permute.xlu0 %552
        %554 = vset.pattern.permute.xlu0 0
        %555 = vperm.xlu0 %554, %v529
        %v556 = vpop.permute.xlu0 %555
        %557 = vset.pattern.permute.xlu0 0
        %558 = vperm.xlu0 %557, %v531
        %v559 = vpop.permute.xlu0 %558
        %560 = vset.pattern.permute.xlu0 0
        %561 = vperm.xlu0 %560, %v533
        %v562 = vpop.permute.xlu0 %561
        %563 = vset.pattern.permute.xlu0 0
        %564 = vperm.xlu0 %563, %v535
        %v565 = vpop.permute.xlu0 %564
        %566 = vset.pattern.permute.xlu0 0
        %567 = vperm.xlu0 %566, %v537
        %v568 = vpop.permute.xlu0 %567
        %569 = vset.pattern.permute.xlu0 0
        %570 = vperm.xlu0 %569, %v539
        %v571 = vpop.permute.xlu0 %570
        %v572 = vperm.slane %v550, %v472
        %v573 = vperm.slane %v553, %v472
        %v574 = vperm.slane %v556, %v472
        %v575 = vperm.slane %v559, %v472
        %v576 = vperm.slane %v562, %v472
        %v577 = vperm.slane %v565, %v472
        %v578 = vperm.slane %v568, %v472
        %v579 = vperm.slane %v571, %v472
        %v580 = vsel %vm481, %v573, %v572
        %v581 = vsel %vm483, %v574, %v580
        %v582 = vsel %vm485, %v575, %v581
        %v583 = vsel %vm487, %v576, %v582
        %v584 = vsel %vm489, %v577, %v583
        %v585 = vsel %vm491, %v578, %v584
        %v586 = vsel %vm493, %v579, %v585
        %v588 = vsel %vm390, %v586, 0.0
        %589 = vadd.xlane.f32.xlu0 %v588
        %v590 = vpop.xlane.xlu0 %589
        %v591 = vrcp.pop %v590
        %v592 = vmul.f32 %v590, %v591
        %v593 = vsub.f32 1.0, %v592
        %v594 = vmul.f32 %v591, %v593
        %v595 = vadd.f32 %v591, %v594
        %vm596 = vweird.f32 %v590
        %vm597 = vweird.f32 %v591
        %vm598 = vmor %vm596, %vm597
        %v599 = vsel %vm598, %v591, %v595
        %v600 = vand.u32 2147483647, %v590
        %vm601 = vcmp.eq.f32.partialorder %v600, 8.507059e+37
        %v602 = vand.u32 %v590, 2147483648
        %v603 = vor.u32 1.1754944e-38, %v602
        %v604 = vsel %vm601, %v603, %v599
        %v606 = vperm.slane %v604, 0
        %v607 = vperm.slane %v604, 1
        %v608 = vperm.slane %v604, 2
        %v609 = vperm.slane %v604, 3
        %v610 = vperm.slane %v604, 4
        %v611 = vperm.slane %v604, 5
        %v612 = vperm.slane %v604, 6
        %v613 = vperm.slane %v604, 7
        %v622 = vmul.f32 %v525, %v606
        %v623 = vmul.f32 %v527, %v607
        %v624 = vmul.f32 %v529, %v608
        %v625 = vmul.f32 %v531, %v609
        %v626 = vmul.f32 %v533, %v610
        %v627 = vmul.f32 %v535, %v611
        %v628 = vmul.f32 %v537, %v612
        %v629 = vmul.f32 %v539, %v613
        %631 = vset.pattern.permute.xlu0 0
        %632 = vperm.xlu0 %631, %v622
        %v633 = vpop.permute.xlu0 %632
        %636 = vset.pattern.permute.xlu0 0
        %637 = vperm.xlu0 %636, %v623
        %v638 = vpop.permute.xlu0 %637
        %641 = vset.pattern.permute.xlu0 0
        %642 = vperm.xlu0 %641, %v624
        %v643 = vpop.permute.xlu0 %642
        %646 = vset.pattern.permute.xlu0 0
        %647 = vperm.xlu0 %646, %v625
        %v648 = vpop.permute.xlu0 %647
        %651 = vset.pattern.permute.xlu0 0
        %652 = vperm.xlu0 %651, %v626
        %v653 = vpop.permute.xlu0 %652
        %656 = vset.pattern.permute.xlu0 0
        %657 = vperm.xlu0 %656, %v627
        %v658 = vpop.permute.xlu0 %657
        %661 = vset.pattern.permute.xlu0 0
        %662 = vperm.xlu0 %661, %v628
        %v663 = vpop.permute.xlu0 %662
        %666 = vset.pattern.permute.xlu0 0
        %667 = vperm.xlu0 %666, %v629
        %v668 = vpop.permute.xlu0 %667
        %v670 = vmul.f32 %v633, %v376
        %v671 = vmul.f32 %v638, %v377
        %v672 = vmul.f32 %v643, %v378
        %v673 = vmul.f32 %v648, %v379
        %v674 = vmul.f32 %v653, %v380
        %v675 = vmul.f32 %v658, %v381
        %v676 = vmul.f32 %v663, %v382
        %v677 = vmul.f32 %v668, %v383
        %v678 = vrot.slane %v670, 4
        %v679 = vadd.f32 %v670, %v678
        %v680 = vrot.slane %v679, 2
        %v681 = vadd.f32 %v679, %v680
        %v682 = vrot.slane %v681, 1
        %v683 = vadd.f32 %v681, %v682
        %v684 = vrot.slane %v671, 4
        %v685 = vadd.f32 %v671, %v684
        %v686 = vrot.slane %v685, 2
        %v687 = vadd.f32 %v685, %v686
        %v688 = vrot.slane %v687, 1
        %v689 = vadd.f32 %v687, %v688
        %v690 = vrot.slane %v672, 4
        %v691 = vadd.f32 %v672, %v690
        %v692 = vrot.slane %v691, 2
        %v693 = vadd.f32 %v691, %v692
        %v694 = vrot.slane %v693, 1
        %v695 = vadd.f32 %v693, %v694
        %v696 = vrot.slane %v673, 4
        %v697 = vadd.f32 %v673, %v696
        %v698 = vrot.slane %v697, 2
        %v699 = vadd.f32 %v697, %v698
        %v700 = vrot.slane %v699, 1
        %v701 = vadd.f32 %v699, %v700
        %v702 = vrot.slane %v674, 4
        %v703 = vadd.f32 %v674, %v702
        %v704 = vrot.slane %v703, 2
        %v705 = vadd.f32 %v703, %v704
        %v706 = vrot.slane %v705, 1
        %v707 = vadd.f32 %v705, %v706
        %v708 = vrot.slane %v675, 4
        %v709 = vadd.f32 %v675, %v708
        %v710 = vrot.slane %v709, 2
        %v711 = vadd.f32 %v709, %v710
        %v712 = vrot.slane %v711, 1
        %v713 = vadd.f32 %v711, %v712
        %v714 = vrot.slane %v676, 4
        %v715 = vadd.f32 %v676, %v714
        %v716 = vrot.slane %v715, 2
        %v717 = vadd.f32 %v715, %v716
        %v718 = vrot.slane %v717, 1
        %v719 = vadd.f32 %v717, %v718
        %v720 = vrot.slane %v677, 4
        %v721 = vadd.f32 %v677, %v720
        %v722 = vrot.slane %v721, 2
        %v723 = vadd.f32 %v721, %v722
        %v724 = vrot.slane %v723, 1
        %v725 = vadd.f32 %v723, %v724
        %v726 = vtanh.pop %v683
        %v727 = vtanh.pop %v689
        %v728 = vtanh.pop %v695
        %v729 = vtanh.pop %v701
        %v730 = vtanh.pop %v707
        %v731 = vtanh.pop %v713
        %v732 = vtanh.pop %v719
        %v733 = vtanh.pop %v725
        %v742 = vsel %vm481, %v727, %v726
        %v743 = vsel %vm483, %v728, %v742
        %v744 = vsel %vm485, %v729, %v743
        %v745 = vsel %vm487, %v730, %v744
        %v746 = vsel %vm489, %v731, %v745
        %v747 = vsel %vm491, %v732, %v746
        %v748 = vsel %vm493, %v733, %v747
        %750 = vst [vmem:[%s301] sm:$0xff] %v748
        %s751 = sand.u32 %s168, 1
        %s752 = scalar_lea.sflag [#allocation4], %s751
        %s753 = sand.u32 %s168, 1
        %s754 = smul.addr %s753, 8
        %s755 = scalar_lea.vmem [#allocation7], %s754
        // Predicated region
        $region53: #{tpu_custom_call.1} parent=43 // pred_check
          %p756 = pneg %p178
        $region54: #{tpu_custom_call.1} parent=43 // pred_check_branch
          %758 = sbr.rel (%p756) target = $region56
        $region55: #{tpu_custom_call.1} parent=43 // pred_region
          %760 = vsyncadd %s752, 0
          %s761 = smul.addr %s24, 8
          %s762 = scalar_lea.hbm %s6, %s761
          %s764 = sshll.u32 %s755, 4
          %s765 = int_to_ptr.vmem [resolvable:$true] %s764
          %s766 = sshll.u32 %s762, 4
          %s767 = int_to_ptr.hbm [resolvable:$true] %s766
          %769 = dma.vmem_to_hbm [thread:$0]  %s765, 128, %s767, %s752
        $region56: #{tpu_custom_call.1} parent=43 // pred_fallthru
          _
      $region44: #{tpu_custom_call.1} parent=5 // pred_fallthru
        _
      %p770 = scmp.le.s32.totalorder 2, %s19
      // Predicated region
      $region57: #{tpu_custom_call.1} parent=5 // pred_check
        %p771 = pneg %p770
      $region58: #{tpu_custom_call.1} parent=5 // pred_check_branch
        %773 = sbr.rel (%p771) target = $region60
      $region59: #{tpu_custom_call.1} parent=5 // pred_region
        %s774 = ssub.s32 %s19, 2
        // Predicated region
        $region61: #{tpu_custom_call.1} parent=59 // pred_check
          %p775 = pneg %p184
        $region62: #{tpu_custom_call.1} parent=59 // pred_check_branch
          %777 = sbr.rel (%p775) target = $region64
        $region63: #{tpu_custom_call.1} parent=59 // pred_region
          %s778 = sand.u32 %s169, 1
          %s779 = scalar_lea.sflag [#allocation4], %s778
          %s780 = sand.u32 %s169, 1
          %s781 = smul.addr %s780, 8
          %s782 = scalar_lea.vmem [#allocation7], %s781
          %784 = dma.done %s779, 128
        $region64: #{tpu_custom_call.1} parent=59 // pred_fallthru
          _
      $region60: #{tpu_custom_call.1} parent=5 // pred_fallthru
        _
    $region6: #{tpu_custom_call.1} parent=1 // loop_footer
      %s23 = sadd.s32 1, %s19
    $region7: #{tpu_custom_call.1} parent=1 // loop_footer_branch
      %18 = sbr.rel target = $region3
    $region8: #{tpu_custom_call.1} parent=1 // loop_exit
      _
    %785 = vsyncpa [#allocation3], 1
    %s786 = scalar_lea.sflag [#allocation3], 1
    %787 = vsyncpa %s786, 1
    %788 = vsyncpa [#allocation6], 1
    %789 = vsyncpa [#allocation4], 1
    %s790 = scalar_lea.sflag [#allocation4], 1
    %791 = vsyncpa %s790, 1

</llo_original>
